<compile_context>
chip_gen: v6e
topology: v6e:2x2x1
jax: 0.10.0
libtpu: 0.0.40
codegen_flags: <defaults>
</compile_context>

<pallas_src>
import functools

import jax
import jax.numpy as jnp
from jax.experimental import pallas as pl
from jax.experimental.pallas import tpu as pltpu

_LANES = 128
_SUBLANES = 8
_DEFAULT_ROW_TILE = 1024  # 1024x128 f32 = 512 KiB / input block; 4 inputs x 2 buffers = 4 MiB VMEM


def _round_up(x, m):
    return ((x + m - 1) // m) * m


def _loss_kernel(pred_ref, actual_ref, ps_ref, y_ref,
                 y_part_ref, loss_part_ref,
                 *, y_pow, row_tile, full_rows, rem_cols):
    """One grid step: reduce a (row_tile, 128) tile to (8, 128) partial sums."""
    i = pl.program_id(0)

    # Upcast in-register (DMA moved the original, possibly sub-32-bit, dtype).
    pred = pred_ref[...].astype(jnp.float32)
    actual = actual_ref[...].astype(jnp.float32)
    ps = ps_ref[...].astype(jnp.float32)
    y = y_ref[...].astype(jnp.float32)

    # Exact element-validity mask: element (global_row, col) is valid iff
    #   global_row < full_rows  or  (global_row == full_rows and col < rem_cols)
    # This covers both the <128-element flat-pad tail and the ragged last grid
    # block (whose out-of-bounds contents are unspecified).
    row_ids = jax.lax.broadcasted_iota(jnp.int32, (row_tile, _LANES), 0)
    col_ids = jax.lax.broadcasted_iota(jnp.int32, (row_tile, _LANES), 1)
    grow = i * row_tile + row_ids
    valid = (grow < full_rows) | ((grow == full_rows) & (col_ids < rem_cols))

    l1 = jnp.abs(pred - actual)
    yp = y ** y_pow  # static exponent (default 1)
    # jnp.where is a select: inf/nan produced by garbage in the masked-off
    # region never propagates.
    loss_term = jnp.where(valid, l1 * yp / ps, 0.0)
    y_term = jnp.where(valid, y, 0.0)

    # Fold rows down to a single (8,128) vreg with cheap VPU adds; the final
    # cross-lane reduction over the tiny partial-sum array happens in JAX.
    nsub = row_tile // _SUBLANES
    loss_part_ref[...] = loss_term.reshape(nsub, _SUBLANES, _LANES).sum(axis=0)
    y_part_ref[...] = y_term.reshape(nsub, _SUBLANES, _LANES).sum(axis=0)


def _as_rows(x, pad_value):
    """Flatten to (rows, 128) in the ORIGINAL dtype.

    Only copies when the element count is not a multiple of 128 (pads with a
    loss-neutral value); otherwise the reshape is a free bitcast.
    """
    x = x.reshape(-1)
    rem = (-x.shape[0]) % _LANES
    if rem:
        x = jnp.concatenate([x, jnp.full((rem,), pad_value, dtype=x.dtype)])
    return x.reshape(-1, _LANES)


@functools.partial(jax.jit, static_argnames=("y_pow",))
def my_loss_abs_dev(pred, actual, ps, y, y_pow=1):
    """Absolute-deviation loss weighted by (y / mean(y))**y_pow / ps."""
    assert pred.shape == actual.shape == ps.shape == y.shape
    n_elems = pred.size

    pred2 = _as_rows(pred, 0)
    actual2 = _as_rows(actual, 0)
    ps2 = _as_rows(ps, 1)   # neutral value; in-kernel mask makes it irrelevant
    y2 = _as_rows(y, 0)

    rows = pred2.shape[0]
    row_tile = min(_DEFAULT_ROW_TILE, _round_up(rows, _SUBLANES))
    num_blocks = -(-rows // row_tile)

    full_rows = n_elems // _LANES
    rem_cols = n_elems % _LANES

    in_spec = pl.BlockSpec((row_tile, _LANES), lambda i: (i, 0))
    out_spec = pl.BlockSpec((_SUBLANES, _LANES), lambda i: (i, 0))
    part_shape = jax.ShapeDtypeStruct((num_blocks * _SUBLANES, _LANES),
                                      jnp.float32)

    kernel = functools.partial(_loss_kernel, y_pow=y_pow, row_tile=row_tile,
                               full_rows=full_rows, rem_cols=rem_cols)

    y_parts, loss_parts = pl.pallas_call(
        kernel,
        out_shape=(part_shape, part_shape),
        grid_spec=pltpu.PrefetchScalarGridSpec(
            num_scalar_prefetch=0,
            grid=(num_blocks,),
            in_specs=[in_spec, in_spec, in_spec, in_spec],
            out_specs=(out_spec, out_spec),
        ),
        compiler_params=pltpu.CompilerParams(
            dimension_semantics=("parallel",)),  # lets v7x shard across both TCs
    )(pred2, actual2, ps2, y2)

    # Tiny final combine in JAX (negligible vs. the bandwidth-bound kernel).
    sum_y = jnp.sum(y_parts)
    sum_loss = jnp.sum(loss_parts)
    mean_y = sum_y / jnp.float32(n_elems)
    return sum_loss / (mean_y ** y_pow)


def _reference(pred, actual, ps, y, y_pow=1):
    loss = jnp.abs(pred - actual)
    yn = (y / jnp.mean(y)) ** y_pow
    w = yn / ps
    return jnp.sum(loss * w)


if __name__ == "__main__":
    key = jax.random.PRNGKey(0)
    k1, k2, k3, k4 = jax.random.split(key, 4)
    shape = (2, 4, 16, 16)  # NCHW-like small example; kernel flattens anyway

    pred = jax.random.normal(k1, shape, dtype=jnp.float32)
    actual = jax.random.normal(k2, shape, dtype=jnp.float32)
    # ps: strictly positive propensity-like scores
    ps = jax.random.uniform(k3, shape, dtype=jnp.float32,
                            minval=0.1, maxval=1.0)
    # y: positive outcomes
    y = jax.random.uniform(k4, shape, dtype=jnp.float32,
                           minval=0.5, maxval=2.0)

    out = my_loss_abs_dev(pred, actual, ps, y, y_pow=1)
    out = jax.block_until_ready(out)

    ref = _reference(pred, actual, ps, y, y_pow=1)
    assert jnp.allclose(out, ref, rtol=1e-5, atol=1e-4), (out, ref)

    print("KERNEL_OK")
</pallas_src>

<mosaic_0001>
module attributes {stable_mosaic.version = 11 : i64} {
  func.func @_loss_kernel(%arg0: i32, %arg1: memref<16x128xf32, #tpu.memory_space<vmem>>, %arg2: memref<16x128xf32, #tpu.memory_space<vmem>>, %arg3: memref<16x128xf32, #tpu.memory_space<vmem>>, %arg4: memref<16x128xf32, #tpu.memory_space<vmem>>, %arg5: memref<8x128xf32, #tpu.memory_space<vmem>>, %arg6: memref<8x128xf32, #tpu.memory_space<vmem>>) attributes {dimension_semantics = [#tpu.dimension_semantics<parallel>], iteration_bounds = array<i64: 1>, scalar_prefetch = 0 : i64, scratch_operands = 0 : i64, tpu.core_type = #tpu.core_type<tc>, window_params = [{transform_indices = @transform_0, window_bounds = array<i64: 16, 128>}, {transform_indices = @transform_1, window_bounds = array<i64: 16, 128>}, {transform_indices = @transform_2, window_bounds = array<i64: 16, 128>}, {transform_indices = @transform_3, window_bounds = array<i64: 16, 128>}, {transform_indices = @transform_4, window_bounds = array<i64: 8, 128>}, {transform_indices = @transform_5, window_bounds = array<i64: 8, 128>}]} {
    %c0 = arith.constant 0 : index
    %c0_0 = arith.constant 0 : index
    %0 = vector.load %arg1[%c0, %c0_0] : memref<16x128xf32, #tpu.memory_space<vmem>>, vector<16x128xf32>
    %c0_1 = arith.constant 0 : index
    %c0_2 = arith.constant 0 : index
    %1 = vector.load %arg2[%c0_1, %c0_2] : memref<16x128xf32, #tpu.memory_space<vmem>>, vector<16x128xf32>
    %c0_3 = arith.constant 0 : index
    %c0_4 = arith.constant 0 : index
    %2 = vector.load %arg3[%c0_3, %c0_4] : memref<16x128xf32, #tpu.memory_space<vmem>>, vector<16x128xf32>
    %c0_5 = arith.constant 0 : index
    %c0_6 = arith.constant 0 : index
    %3 = vector.load %arg4[%c0_5, %c0_6] : memref<16x128xf32, #tpu.memory_space<vmem>>, vector<16x128xf32>
    %4 = tpu.iota {dimensions = array<i32: 0>} : vector<16x128xi32>
    %5 = tpu.iota {dimensions = array<i32: 1>} : vector<16x128xi32>
    %c16_i32 = arith.constant 16 : i32
    %6 = arith.muli %arg0, %c16_i32 : i32
    %7 = vector.broadcast %6 : i32 to vector<16x128xi32>
    %8 = arith.addi %7, %4 : vector<16x128xi32>
    %c16_i32_7 = arith.constant 16 : i32
    %9 = vector.broadcast %c16_i32_7 : i32 to vector<16x128xi32>
    %10 = arith.cmpi slt, %8, %9 : vector<16x128xi32>
    %c16_i32_8 = arith.constant 16 : i32
    %11 = vector.broadcast %c16_i32_8 : i32 to vector<16x128xi32>
    %12 = arith.cmpi eq, %8, %11 : vector<16x128xi32>
    %c0_i32 = arith.constant 0 : i32
    %13 = vector.broadcast %c0_i32 : i32 to vector<16x128xi32>
    %14 = arith.cmpi slt, %5, %13 : vector<16x128xi32>
    %15 = arith.andi %12, %14 : vector<16x128xi1>
    %16 = arith.ori %10, %15 : vector<16x128xi1>
    %17 = arith.subf %0, %1 : vector<16x128xf32>
    %18 = math.absf %17 : vector<16x128xf32>
    %19 = arith.mulf %18, %3 : vector<16x128xf32>
    %20 = arith.divf %19, %2 : vector<16x128xf32>
    %cst = arith.constant 0.000000e+00 : f32
    %21 = vector.broadcast %cst : f32 to vector<16x128xf32>
    %22 = arith.select %16, %20, %21 : vector<16x128xi1>, vector<16x128xf32>
    %cst_9 = arith.constant 0.000000e+00 : f32
    %23 = vector.broadcast %cst_9 : f32 to vector<16x128xf32>
    %24 = arith.select %16, %3, %23 : vector<16x128xi1>, vector<16x128xf32>
    %25 = vector.shape_cast %22 : vector<16x128xf32> to vector<2x8x128xf32>
    %cst_10 = arith.constant dense<0.000000e+00> : vector<8x128xf32>
    %26 = vector.multi_reduction <add>, %25, %cst_10 [0] : vector<2x8x128xf32> to vector<8x128xf32>
    %c0_11 = arith.constant 0 : index
    %c0_12 = arith.constant 0 : index
    %27 = vector.load %arg6[%c0_11, %c0_12] : memref<8x128xf32, #tpu.memory_space<vmem>>, vector<8x128xf32>
    tpu.vector_store %arg6[%c0_11, %c0_12], %26 {strides = array<i32>} : memref<8x128xf32, #tpu.memory_space<vmem>>, vector<8x128xf32>,
    %28 = vector.shape_cast %24 : vector<16x128xf32> to vector<2x8x128xf32>
    %cst_13 = arith.constant dense<0.000000e+00> : vector<8x128xf32>
    %29 = vector.multi_reduction <add>, %28, %cst_13 [0] : vector<2x8x128xf32> to vector<8x128xf32>
    %c0_14 = arith.constant 0 : index
    %c0_15 = arith.constant 0 : index
    %30 = vector.load %arg5[%c0_14, %c0_15] : memref<8x128xf32, #tpu.memory_space<vmem>>, vector<8x128xf32>
    tpu.vector_store %arg5[%c0_14, %c0_15], %29 {strides = array<i32>} : memref<8x128xf32, #tpu.memory_space<vmem>>, vector<8x128xf32>,
    return
  }
  func.func @transform_0(%arg0: i32) -> (i32, i32) {
    %c0_i32 = arith.constant 0 : i32
    %c0_i32_0 = arith.constant 0 : i32
    return %arg0, %c0_i32 : i32, i32
  }
  func.func @transform_1(%arg0: i32) -> (i32, i32) {
    %c0_i32 = arith.constant 0 : i32
    %c0_i32_0 = arith.constant 0 : i32
    return %arg0, %c0_i32 : i32, i32
  }
  func.func @transform_2(%arg0: i32) -> (i32, i32) {
    %c0_i32 = arith.constant 0 : i32
    %c0_i32_0 = arith.constant 0 : i32
    return %arg0, %c0_i32 : i32, i32
  }
  func.func @transform_3(%arg0: i32) -> (i32, i32) {
    %c0_i32 = arith.constant 0 : i32
    %c0_i32_0 = arith.constant 0 : i32
    return %arg0, %c0_i32 : i32, i32
  }
  func.func @transform_4(%arg0: i32) -> (i32, i32) {
    %c0_i32 = arith.constant 0 : i32
    %c0_i32_0 = arith.constant 0 : i32
    return %arg0, %c0_i32 : i32, i32
  }
  func.func @transform_5(%arg0: i32) -> (i32, i32) {
    %c0_i32 = arith.constant 0 : i32
    %c0_i32_0 = arith.constant 0 : i32
    return %arg0, %c0_i32 : i32, i32
  }
}

</mosaic_0001>

<llo_original>
// kernel: my_loss_abs_dev.1
$region0: #{my_loss_abs_dev.1}
  #allocation0 [shape = 'u32[]', space=smem, size = 0x4, offset = 0x4, fixed_abs, tag = 'smem constant byte address 0x4 - core index']
  #allocation1 [shape = 'u32[144,128]{1,0:T(1,128)}', space=vmem, size = 0x12000, scoped, tag = 'internal scratch']
  %s0 = inlined_call_operand.vmem [shape: f32[16,128], index: 0, kind: input, shape index: {}]
  %s1 = inlined_call_operand.vmem [shape: f32[16,128], index: 1, kind: input, shape index: {}]
  %s2 = inlined_call_operand.vmem [shape: f32[16,128], index: 2, kind: input, shape index: {}]
  %s3 = inlined_call_operand.vmem [shape: f32[16,128], index: 3, kind: input, shape index: {}]
  %s4 = inlined_call_operand.vmem [shape: f32[8,128], index: 4, kind: output, shape index: {0}]
  %s5 = inlined_call_operand.vmem [shape: f32[8,128], index: 5, kind: output, shape index: {1}]
  %6 = xla_tuple %s4, %s5
  %s7 = sld [smem:[#allocation0]]
  $region34: #{my_loss_abs_dev.1} parent=0
    _
  %s9 = ssub.s32 1, %s7
  %s10 = scalar_select 0, %s9, %s7
  // Predicated region
  $region2: #{my_loss_abs_dev.1} parent=0 // pred_check
    _
  $region3: #{my_loss_abs_dev.1} parent=0 // pred_check_branch
    %12 = sbr.rel (0) target = $region5
  $region4: #{my_loss_abs_dev.1} parent=0 // pred_region
    _
  $region5: #{my_loss_abs_dev.1} parent=0 // pred_fallthru
    _
  // Predicated region
  $region6: #{my_loss_abs_dev.1} parent=0 // pred_check
    _
  $region7: #{my_loss_abs_dev.1} parent=0 // pred_check_branch
    %14 = sbr.rel (0) target = $region9
  $region8: #{my_loss_abs_dev.1} parent=0 // pred_region
    _
  $region9: #{my_loss_abs_dev.1} parent=0 // pred_fallthru
    _
  // Predicated region
  $region10: #{my_loss_abs_dev.1} parent=0 // pred_check
    _
  $region11: #{my_loss_abs_dev.1} parent=0 // pred_check_branch
    %16 = sbr.rel (0) target = $region13
  $region12: #{my_loss_abs_dev.1} parent=0 // pred_region
    _
  $region13: #{my_loss_abs_dev.1} parent=0 // pred_fallthru
    _
  // Predicated region
  $region14: #{my_loss_abs_dev.1} parent=0 // pred_check
    _
  $region15: #{my_loss_abs_dev.1} parent=0 // pred_check_branch
    %18 = sbr.rel (0) target = $region17
  $region16: #{my_loss_abs_dev.1} parent=0 // pred_region
    _
  $region17: #{my_loss_abs_dev.1} parent=0 // pred_fallthru
    _
  %v19 = vld [vmem:[%s0] sm:$0xff]
  %v20 = vld [vmem:[%s0 + $0x8] sm:$0xff]
  %v21 = vld [vmem:[%s1] sm:$0xff]
  %v22 = vld [vmem:[%s1 + $0x8] sm:$0xff]
  %v23 = vld [vmem:[%s2] sm:$0xff]
  %v24 = vld [vmem:[%s2 + $0x8] sm:$0xff]
  %v25 = vld [vmem:[%s3] sm:$0xff]
  %v26 = vld [vmem:[%s3 + $0x8] sm:$0xff]
  %v27 = vlaneseq
  %v28 = vshrl.u32 %v27, 7
  %v29 = vadd.s32 %v28, 8
  %v30 = vlaneseq
  %v31 = vand.u32 %v30, 127
  %s32 = smul.u32 0, 16
  %v33 = vstv %s32
  %v34 = vadd.s32 %v33, %v28
  %v35 = vadd.s32 %v33, %v29
  %vm36 = vcmp.lt.s32.totalorder %v34, 16
  %vm37 = vcmp.lt.s32.totalorder %v35, 16
  %vm38 = vcmp.eq.s32.totalorder %v34, 16
  %vm39 = vcmp.eq.s32.totalorder %v35, 16
  %vm40 = vcmp.lt.s32.totalorder %v31, 0
  %vm41 = vmand %vm38, %vm40
  %vm42 = vmand %vm39, %vm40
  %vm43 = vmor %vm36, %vm41
  %vm44 = vmor %vm37, %vm42
  %v45 = vsub.f32 %v19, %v21
  %v46 = vsub.f32 %v20, %v22
  %v47 = vand.u32 2147483647, %v45
  %v48 = vand.u32 2147483647, %v46
  %v49 = vmul.f32 %v47, %v25
  %v50 = vmul.f32 %v48, %v26
  %v51 = vrcp.pop %v23
  %v52 = vmul.f32 %v49, %v51
  %v53 = vrcp.pop %v24
  %v54 = vmul.f32 %v50, %v53
  %v55 = vsel %vm43, %v52, 0.0
  %v56 = vsel %vm44, %v54, 0.0
  %v57 = vsel %vm43, %v25, 0.0
  %v58 = vsel %vm44, %v26, 0.0
  %v59 = vadd.f32 %v55, %v56
  %60 = vst [vmem:[%s5] sm:$0xff] %v59
  %v61 = vadd.f32 %v57, %v58
  %62 = vst [vmem:[%s4] sm:$0xff] %v61
  // Predicated region
  $region18: #{my_loss_abs_dev.1} parent=0 // pred_check
    _
  $region19: #{my_loss_abs_dev.1} parent=0 // pred_check_branch
    %64 = sbr.rel (0) target = $region21
  $region20: #{my_loss_abs_dev.1} parent=0 // pred_region
    _
  $region21: #{my_loss_abs_dev.1} parent=0 // pred_fallthru
    _
  // Predicated region
  $region22: #{my_loss_abs_dev.1} parent=0 // pred_check
    _
  $region23: #{my_loss_abs_dev.1} parent=0 // pred_check_branch
    %66 = sbr.rel (0) target = $region25
  $region24: #{my_loss_abs_dev.1} parent=0 // pred_region
    _
  $region25: #{my_loss_abs_dev.1} parent=0 // pred_fallthru
    _
  // Predicated region
  $region26: #{my_loss_abs_dev.1} parent=0 // pred_check
    _
  $region27: #{my_loss_abs_dev.1} parent=0 // pred_check_branch
    %68 = sbr.rel (0) target = $region29
  $region28: #{my_loss_abs_dev.1} parent=0 // pred_region
    _
  $region29: #{my_loss_abs_dev.1} parent=0 // pred_fallthru
    _
  // Predicated region
  $region30: #{my_loss_abs_dev.1} parent=0 // pred_check
    _
  $region31: #{my_loss_abs_dev.1} parent=0 // pred_check_branch
    %70 = sbr.rel (0) target = $region33
  $region32: #{my_loss_abs_dev.1} parent=0 // pred_region
    _
  $region33: #{my_loss_abs_dev.1} parent=0 // pred_fallthru
    _

</llo_original>
